<compile_context>
chip_gen: v7x
topology: tpu7x:2x2x1
jax: 0.10.0
libtpu: 0.0.40
codegen_flags: <defaults>
</compile_context>

<pallas_src>
import jax
import jax.numpy as jnp
from jax import lax
from jax.experimental import pallas as pl
from jax.experimental.pallas import tpu as pltpu


HIDDEN = 128  # matches nn.Linear(img_dim, 128)


def _disc_kernel(x_ref, w1_ref, b1_ref, w2_ref, b2_ref, o_ref):
    # x : [tile_b, D] native dtype  w1: [128, D] bf16 (PyTorch layout)
    # b1: [128, 1] f32              w2: [128, 1] f32 (col form of [1, 128])
    # b2: [1, 1] f32 (SMEM)         o : [1, tile_b] f32 (lane-dense)

    # Cast to bf16 in-kernel (single HBM pass over x in its native dtype).
    x_bf = x_ref[...].astype(jnp.bfloat16)

    # Linear(img_dim, 128), batch-on-lanes orientation:
    #   hT = w1 . x^T  -> [128, tile_b], f32 MXU accumulate.
    hT = lax.dot_general(
        w1_ref[...],
        x_bf,
        dimension_numbers=(((1,), (1,)), ((), ())),
        preferred_element_type=jnp.float32,
    )
    hT = hT + b1_ref[...]                      # [128, tile_b] + [128, 1]

    # LeakyReLU(negative_slope=0.1), f32 on the VPU.
    hT = jnp.where(hT > 0, hT, 0.1 * hT)

    # Linear(128, 1): per-lane sublane reduction over the hidden axis
    # (VPU multiplies + vreg adds + one 8-wide XLU reduce), not an N=1 matmul.
    z = jnp.sum(hT * w2_ref[...], axis=0, keepdims=True) + b2_ref[0, 0]

    # Sigmoid on the lane-dense [1, tile_b] slab (EUP exp; exact divide is
    # hidden under the DMA on this HBM-bound kernel).
    o_ref[...] = (1.0 / (1.0 + jnp.exp(-z))).astype(o_ref.dtype)


def _round_up(a: int, m: int) -> int:
    return ((a + m - 1) // m) * m


def _pick_tile_b(B: int, D: int, itemsize: int) -> int:
    """Pick tile_b by bytes-per-grid-step, multiple of 128 (lane-dense output)."""
    bytes_per_row = max(1, itemsize * D)
    # ~2 MiB of x per step amortizes the ~0.35 us per-step overhead.
    target = _round_up(max(1, (2 * 1024 * 1024) // bytes_per_row), 128)
    # Double-buffered x stream <= ~16 MiB.
    cap_x = max(128, ((16 * 1024 * 1024) // (2 * bytes_per_row)) // 128 * 128)
    # Keep the f32 [128, tile_b] hidden activation <= ~8 MiB (small-D guard).
    cap_h = max(128, ((8 * 1024 * 1024) // (HIDDEN * 4)) // 128 * 128)
    return max(128, min(target, cap_x, cap_h, _round_up(B, 128)))


def discriminator_forward(x, w1, b1, w2, b2, *, tile_b: int | None = None):
    """Forward pass of the Discriminator.

    x : [B, img_dim]  (streamed in its native dtype; cast to bf16 in-kernel
                       for the MXU — a documented precision choice)
    w1: [128, img_dim], b1: [128]   (PyTorch nn.Linear conventions)
    w2: [1, 128],       b2: [1]
    Returns [B, 1] float32 sigmoid probabilities.
    """
    B, D = x.shape
    assert w1.shape == (HIDDEN, D)
    assert w2.reshape(-1).shape == (HIDDEN,)

    if tile_b is None:
        tile_b = _pick_tile_b(B, D, jnp.dtype(x.dtype).itemsize)
    else:
        tile_b = max(128, _round_up(tile_b, 128))

    num_tiles = pl.cdiv(B, tile_b)
    b_pad = num_tiles * tile_b

    w1_bf = w1.astype(jnp.bfloat16)                       # [128, D] (tiny, resident)
    b1_col = b1.reshape(HIDDEN, 1).astype(jnp.float32)    # [128, 1]
    w2_col = w2.reshape(HIDDEN, 1).astype(jnp.float32)    # [128, 1]
    b2_2d = b2.reshape(1, 1).astype(jnp.float32)          # [1, 1] (SMEM scalar)

    out = pl.pallas_call(
        _disc_kernel,
        out_shape=jax.ShapeDtypeStruct((1, b_pad), jnp.float32),
        grid=(num_tiles,),
        in_specs=[
            pl.BlockSpec((tile_b, D), lambda i: (i, 0)),   # x: streamed per tile
            pl.BlockSpec((HIDDEN, D), lambda i: (0, 0)),   # w1: resident
            pl.BlockSpec((HIDDEN, 1), lambda i: (0, 0)),   # b1: resident
            pl.BlockSpec((HIDDEN, 1), lambda i: (0, 0)),   # w2 col: resident
            pl.BlockSpec(memory_space=pltpu.MemorySpace.SMEM),  # b2 scalar
        ],
        out_specs=pl.BlockSpec((1, tile_b), lambda i: (0, i)),  # lane-dense store
        compiler_params=pltpu.CompilerParams(
            dimension_semantics=("parallel",),      # megacore split on v7x
            vmem_limit_bytes=48 * 1024 * 1024,      # explicit, v7x-safe (<64 MiB)
        ),
    )(x, w1_bf, b1_col, w2_col, b2_2d)

    # Drop the tail columns written from unspecified padded input rows.
    return out[0, :B].reshape(B, 1)


def _init_params(key, img_dim):
    """Deterministic init matching PyTorch nn.Linear default U[-1/sqrt(in), 1/sqrt(in)]."""
    k1, k2, k3, k4 = jax.random.split(key, 4)
    bound1 = 1.0 / jnp.sqrt(img_dim)
    bound2 = 1.0 / jnp.sqrt(HIDDEN)
    w1 = jax.random.uniform(k1, (HIDDEN, img_dim), jnp.float32, -bound1, bound1)
    b1 = jax.random.uniform(k2, (HIDDEN,), jnp.float32, -bound1, bound1)
    w2 = jax.random.uniform(k3, (1, HIDDEN), jnp.float32, -bound2, bound2)
    b2 = jax.random.uniform(k4, (1,), jnp.float32, -bound2, bound2)
    return w1, b1, w2, b2


def _reference(x, w1, b1, w2, b2):
    h = x @ w1.T + b1
    h = jnp.where(h > 0, h, 0.1 * h)
    return jax.nn.sigmoid(h @ w2.T + b2)


if __name__ == "__main__":
    key = jax.random.PRNGKey(0)
    kx, kp, ky = jax.random.split(key, 3)

    # Small synthetic shapes consistent with the module.
    B, IMG_DIM = 8, 64
    x = jax.random.normal(kx, (B, IMG_DIM), jnp.float32)
    w1, b1, w2, b2 = _init_params(kp, IMG_DIM)

    out = jax.block_until_ready(discriminator_forward(x, w1, b1, w2, b2))
    ref = _reference(x, w1, b1, w2, b2)
    assert out.shape == (B, 1)
    # bf16 matmul inputs => loosen tolerance vs f32 reference.
    assert jnp.allclose(out, ref, atol=2e-2, rtol=2e-2), float(jnp.max(jnp.abs(out - ref)))

    # Second check: multiple grid steps plus a partial tail block.
    B2 = 200
    x2 = jax.random.normal(ky, (B2, IMG_DIM), jnp.float32)
    out2 = jax.block_until_ready(discriminator_forward(x2, w1, b1, w2, b2, tile_b=128))
    ref2 = _reference(x2, w1, b1, w2, b2)
    assert out2.shape == (B2, 1)
    assert jnp.allclose(out2, ref2, atol=2e-2, rtol=2e-2), float(jnp.max(jnp.abs(out2 - ref2)))

    print("KERNEL_OK")
</pallas_src>

<mosaic_0001>
module attributes {stable_mosaic.version = 11 : i64} {
  func.func @_disc_kernel(%arg0: i32, %arg1: memref<128x64xf32, #tpu.memory_space<vmem>>, %arg2: memref<128x64xbf16, #tpu.memory_space<vmem>>, %arg3: memref<128x1xf32, #tpu.memory_space<vmem>>, %arg4: memref<128x1xf32, #tpu.memory_space<vmem>>, %arg5: memref<1x1xf32, #tpu.memory_space<smem>>, %arg6: memref<1x128xf32, #tpu.memory_space<vmem>>) attributes {dimension_semantics = [#tpu.dimension_semantics<parallel>], iteration_bounds = array<i64: 1>, scalar_prefetch = 0 : i64, scratch_operands = 0 : i64, tpu.core_type = #tpu.core_type<tc>, window_params = [{transform_indices = @transform_0, window_bounds = array<i64: 128, 64>}, {pipeline_mode = #tpu.pipeline_mode<synchronous>, transform_indices = @transform_1, window_bounds = array<i64: 128, 64>}, {pipeline_mode = #tpu.pipeline_mode<synchronous>, transform_indices = @transform_2, window_bounds = array<i64: 128, 1>}, {pipeline_mode = #tpu.pipeline_mode<synchronous>, transform_indices = @transform_3, window_bounds = array<i64: 128, 1>}, {transform_indices = @transform_4, window_bounds = array<i64: 1, 1>}, {transform_indices = @transform_5, window_bounds = array<i64: 1, 128>}]} {
    %c0 = arith.constant 0 : index
    %c0_0 = arith.constant 0 : index
    %0 = vector.load %arg1[%c0, %c0_0] : memref<128x64xf32, #tpu.memory_space<vmem>>, vector<128x64xf32>
    %1 = arith.truncf %0 : vector<128x64xf32> to vector<128x64xbf16>
    %c0_1 = arith.constant 0 : index
    %c0_2 = arith.constant 0 : index
    %2 = vector.load %arg2[%c0_1, %c0_2] : memref<128x64xbf16, #tpu.memory_space<vmem>>, vector<128x64xbf16>
    %cst = arith.constant dense<0.000000e+00> : vector<128x128xf32>
    %3 = tpu.matmul %2, %1, %cst {dimension_numbers = #tpu.dot_dimension_numbers<[1], [1], [0], [0], [0, 0, 1, 0], [], []>} : vector<128x64xbf16>, vector<128x64xbf16>, vector<128x128xf32> -> vector<128x128xf32>
    %c0_3 = arith.constant 0 : index
    %c0_4 = arith.constant 0 : index
    %4 = vector.load %arg3[%c0_3, %c0_4] : memref<128x1xf32, #tpu.memory_space<vmem>>, vector<128x1xf32>
    %5 = vector.broadcast %4 : vector<128x1xf32> to vector<128x128xf32>
    %6 = arith.addf %3, %5 : vector<128x128xf32>
    %cst_5 = arith.constant 0.000000e+00 : f32
    %7 = vector.broadcast %cst_5 : f32 to vector<128x128xf32>
    %8 = arith.cmpf ogt, %6, %7 : vector<128x128xf32>
    %cst_6 = arith.constant 1.000000e-01 : f32
    %9 = vector.broadcast %cst_6 : f32 to vector<128x128xf32>
    %10 = arith.mulf %9, %6 : vector<128x128xf32>
    %11 = arith.select %8, %6, %10 : vector<128x128xi1>, vector<128x128xf32>
    %c0_7 = arith.constant 0 : index
    %c0_8 = arith.constant 0 : index
    %12 = vector.load %arg4[%c0_7, %c0_8] : memref<128x1xf32, #tpu.memory_space<vmem>>, vector<128x1xf32>
    %13 = vector.broadcast %12 : vector<128x1xf32> to vector<128x128xf32>
    %14 = arith.mulf %11, %13 : vector<128x128xf32>
    %cst_9 = arith.constant dense<0.000000e+00> : vector<128xf32>
    %15 = vector.multi_reduction <add>, %14, %cst_9 [0] : vector<128x128xf32> to vector<128xf32>
    %16 = vector.shape_cast %15 : vector<128xf32> to vector<1x128xf32>
    %c0_10 = arith.constant 0 : index
    %c0_11 = arith.constant 0 : index
    %17 = memref.load %arg5[%c0_10, %c0_11] : memref<1x1xf32, #tpu.memory_space<smem>>
    %18 = vector.broadcast %17 : f32 to vector<1x128xf32>
    %19 = arith.addf %16, %18 : vector<1x128xf32>
    %cst_12 = arith.constant 0.000000e+00 : f32
    %20 = vector.broadcast %cst_12 : f32 to vector<1x128xf32>
    %21 = arith.subf %20, %19 : vector<1x128xf32>
    %22 = math.exp %21 : vector<1x128xf32>
    %cst_13 = arith.constant 1.000000e+00 : f32
    %23 = vector.broadcast %cst_13 : f32 to vector<1x128xf32>
    %24 = arith.addf %23, %22 : vector<1x128xf32>
    %cst_14 = arith.constant 1.000000e+00 : f32
    %25 = vector.broadcast %cst_14 : f32 to vector<1x128xf32>
    %26 = arith.divf %25, %24 : vector<1x128xf32>
    %c0_15 = arith.constant 0 : index
    %c0_16 = arith.constant 0 : index
    %27 = vector.load %arg6[%c0_15, %c0_16] : memref<1x128xf32, #tpu.memory_space<vmem>>, vector<1x128xf32>
    tpu.vector_store %arg6[%c0_15, %c0_16], %26 {strides = array<i32>} : memref<1x128xf32, #tpu.memory_space<vmem>>, vector<1x128xf32>,
    return
  }
  func.func @transform_0(%arg0: i32) -> (i32, i32) {
    %c0_i32 = arith.constant 0 : i32
    %c0_i32_0 = arith.constant 0 : i32
    return %arg0, %c0_i32 : i32, i32
  }
  func.func @transform_1(%arg0: i32) -> (i32, i32) {
    %c0_i32 = arith.constant 0 : i32
    %c0_i32_0 = arith.constant 0 : i32
    %c0_i32_1 = arith.constant 0 : i32
    return %c0_i32, %c0_i32_0 : i32, i32
  }
  func.func @transform_2(%arg0: i32) -> (i32, i32) {
    %c0_i32 = arith.constant 0 : i32
    %c0_i32_0 = arith.constant 0 : i32
    %c0_i32_1 = arith.constant 0 : i32
    return %c0_i32, %c0_i32_0 : i32, i32
  }
  func.func @transform_3(%arg0: i32) -> (i32, i32) {
    %c0_i32 = arith.constant 0 : i32
    %c0_i32_0 = arith.constant 0 : i32
    %c0_i32_1 = arith.constant 0 : i32
    return %c0_i32, %c0_i32_0 : i32, i32
  }
  func.func @transform_4(%arg0: i32) -> (i32, i32) {
    %c0_i32 = arith.constant 0 : i32
    %c0_i32_0 = arith.constant 0 : i32
    %c0_i32_1 = arith.constant 0 : i32
    return %c0_i32, %c0_i32_0 : i32, i32
  }
  func.func @transform_5(%arg0: i32) -> (i32, i32) {
    %c0_i32 = arith.constant 0 : i32
    %c0_i32_0 = arith.constant 0 : i32
    return %c0_i32, %arg0 : i32, i32
  }
}

</mosaic_0001>

<llo_original>
// kernel: tpu_custom_call.1
$region0: #{tpu_custom_call.1}
  #allocation0 [shape = 'u32[]', space=smem, size = 0x4, offset = 0x4, fixed_abs, tag = 'smem constant byte address 0x4 - core index']
  #allocation1 [shape = 'u32[144,128]{1,0:T(1,128)}', space=vmem, size = 0x12000, scoped, tag = 'internal scratch']
  #allocation2 [shape = 'f32[1,1]{1,0:T(1,128)S(6)}', space=smem, size = 0x200, scoped, tag = 'scoped memory for tpu_custom_call.1']
  %s0 = inlined_call_operand.vmem [shape: f32[8,64], index: 0, kind: input, shape index: {}]
  %s1 = inlined_call_operand.vmem [shape: bf16[128,64], index: 1, kind: input, shape index: {}]
  %s2 = inlined_call_operand.vmem [shape: f32[128,1], index: 2, kind: input, shape index: {}]
  %s3 = inlined_call_operand.vmem [shape: f32[128,1], index: 3, kind: input, shape index: {}]
  %s4 = inlined_call_operand.<no memory space> [shape: f32[1,1], index: 4, kind: input, shape index: {}]
  %s5 = inlined_call_operand.hbm [shape: f32[1,128], index: 5, kind: output, shape index: {}]
  %s6 = sld [smem:[#allocation0]]
  $region30: #{tpu_custom_call.1} parent=0
    _
  %s8 = ssub.s32 1, %s6
  %s9 = scalar_select 0, %s8, %s6
  %10 = sst [smem:[#allocation2]] %s4
  $region1: #{tpu_custom_call.1} parent=0
    #allocation3 [shape = 'u8[512]{0}', space=vmem, size = 0x400, scoped, tag = 'output window, operand 0, single buffered']
    #allocation4 [shape = 's32[1]{0}', space=sflag, size = 0x4, scoped, tag = 'scoped memory for tpu_custom_call.1']
    %11 = vsyncpa [#allocation4], 0
    // Predicated region
    $region2: #{tpu_custom_call.1} parent=1 // pred_check
      _
    $region3: #{tpu_custom_call.1} parent=1 // pred_check_branch
      %13 = sbr.rel (0) target = $region5
    $region4: #{tpu_custom_call.1} parent=1 // pred_region
      _
    $region5: #{tpu_custom_call.1} parent=1 // pred_fallthru
      _
    // Predicated region
    $region6: #{tpu_custom_call.1} parent=1 // pred_check
      _
    $region7: #{tpu_custom_call.1} parent=1 // pred_check_branch
      %15 = sbr.rel (0) target = $region9
    $region8: #{tpu_custom_call.1} parent=1 // pred_region
      _
    $region9: #{tpu_custom_call.1} parent=1 // pred_fallthru
      _
    // Predicated region
    $region10: #{tpu_custom_call.1} parent=1 // pred_check
      _
    $region11: #{tpu_custom_call.1} parent=1 // pred_check_branch
      %17 = sbr.rel (0) target = $region13
    $region12: #{tpu_custom_call.1} parent=1 // pred_region
      _
    $region13: #{tpu_custom_call.1} parent=1 // pred_fallthru
      _
    // Predicated region
    $region14: #{tpu_custom_call.1} parent=1 // pred_check
      _
    $region15: #{tpu_custom_call.1} parent=1 // pred_check_branch
      %19 = sbr.rel (0) target = $region17
    $region16: #{tpu_custom_call.1} parent=1 // pred_region
      _
    $region17: #{tpu_custom_call.1} parent=1 // pred_fallthru
      _
    // Predicated region
    $region18: #{tpu_custom_call.1} parent=1 // pred_check
      _
    $region19: #{tpu_custom_call.1} parent=1 // pred_check_branch
      %21 = sbr.rel (0) target = $region21
    $region20: #{tpu_custom_call.1} parent=1 // pred_region
      _
    $region21: #{tpu_custom_call.1} parent=1 // pred_fallthru
      _
    %v23 = vld [vmem:[%s0] sm:$0xff]
    %v24 = vld [vmem:[%s0 + $0x8] sm:$0xff]
    %v25 = vld [vmem:[%s0 + $0x10] sm:$0xff]
    %v26 = vld [vmem:[%s0 + $0x18] sm:$0xff]
    %v27 = vld [vmem:[%s0 + $0x20] sm:$0xff]
    %v28 = vld [vmem:[%s0 + $0x28] sm:$0xff]
    %v29 = vld [vmem:[%s0 + $0x30] sm:$0xff]
    %v30 = vld [vmem:[%s0 + $0x38] sm:$0xff]
    %v31 = vld [vmem:[%s0 + $0x40] sm:$0xff]
    %v32 = vld [vmem:[%s0 + $0x48] sm:$0xff]
    %v33 = vld [vmem:[%s0 + $0x50] sm:$0xff]
    %v34 = vld [vmem:[%s0 + $0x58] sm:$0xff]
    %v35 = vld [vmem:[%s0 + $0x60] sm:$0xff]
    %v36 = vld [vmem:[%s0 + $0x68] sm:$0xff]
    %v37 = vld [vmem:[%s0 + $0x70] sm:$0xff]
    %v38 = vld [vmem:[%s0 + $0x78] sm:$0xff]
    %v39 = vpack.c.bf16 %v24, %v23
    %v40 = vpack.c.bf16 %v26, %v25
    %v41 = vpack.c.bf16 %v28, %v27
    %v42 = vpack.c.bf16 %v30, %v29
    %v43 = vpack.c.bf16 %v32, %v31
    %v44 = vpack.c.bf16 %v34, %v33
    %v45 = vpack.c.bf16 %v36, %v35
    %v46 = vpack.c.bf16 %v38, %v37
    %v47 = vld [vmem:[%s1] sm:$0xf]
    %v48 = vld [vmem:[%s1 + $0x4] sm:$0xf]
    %v49 = vld [vmem:[%s1 + $0x8] sm:$0xf]
    %v50 = vld [vmem:[%s1 + $0xc] sm:$0xf]
    %v51 = vld [vmem:[%s1 + $0x10] sm:$0xf]
    %v52 = vld [vmem:[%s1 + $0x14] sm:$0xf]
    %v53 = vld [vmem:[%s1 + $0x18] sm:$0xf]
    %v54 = vld [vmem:[%s1 + $0x1c] sm:$0xf]
    %v55 = vld [vmem:[%s1 + $0x20] sm:$0xf]
    %v56 = vld [vmem:[%s1 + $0x24] sm:$0xf]
    %v57 = vld [vmem:[%s1 + $0x28] sm:$0xf]
    %v58 = vld [vmem:[%s1 + $0x2c] sm:$0xf]
    %v59 = vld [vmem:[%s1 + $0x30] sm:$0xf]
    %v60 = vld [vmem:[%s1 + $0x34] sm:$0xf]
    %v61 = vld [vmem:[%s1 + $0x38] sm:$0xf]
    %v62 = vld [vmem:[%s1 + $0x3c] sm:$0xf]
    %v63 = vld [vmem:[%s2] sm:$0xff]
    %v64 = vld [vmem:[%s2 + $0x8] sm:$0xff]
    %v65 = vld [vmem:[%s2 + $0x10] sm:$0xff]
    %v66 = vld [vmem:[%s2 + $0x18] sm:$0xff]
    %v67 = vld [vmem:[%s2 + $0x20] sm:$0xff]
    %v68 = vld [vmem:[%s2 + $0x28] sm:$0xff]
    %v69 = vld [vmem:[%s2 + $0x30] sm:$0xff]
    %v70 = vld [vmem:[%s2 + $0x38] sm:$0xff]
    %v71 = vld [vmem:[%s2 + $0x40] sm:$0xff]
    %v72 = vld [vmem:[%s2 + $0x48] sm:$0xff]
    %v73 = vld [vmem:[%s2 + $0x50] sm:$0xff]
    %v74 = vld [vmem:[%s2 + $0x58] sm:$0xff]
    %v75 = vld [vmem:[%s2 + $0x60] sm:$0xff]
    %v76 = vld [vmem:[%s2 + $0x68] sm:$0xff]
    %v77 = vld [vmem:[%s2 + $0x70] sm:$0xff]
    %v78 = vld [vmem:[%s2 + $0x78] sm:$0xff]
    %80 = vset.pattern.permute.xlu0 0
    %81 = vperm.xlu0 %80, %v63
    %v82 = vpop.permute.xlu0 %81
    %85 = vset.pattern.permute.xlu0 0
    %86 = vperm.xlu0 %85, %v64
    %v87 = vpop.permute.xlu0 %86
    %90 = vset.pattern.permute.xlu0 0
    %91 = vperm.xlu0 %90, %v65
    %v92 = vpop.permute.xlu0 %91
    %95 = vset.pattern.permute.xlu0 0
    %96 = vperm.xlu0 %95, %v66
    %v97 = vpop.permute.xlu0 %96
    %100 = vset.pattern.permute.xlu0 0
    %101 = vperm.xlu0 %100, %v67
    %v102 = vpop.permute.xlu0 %101
    %105 = vset.pattern.permute.xlu0 0
    %106 = vperm.xlu0 %105, %v68
    %v107 = vpop.permute.xlu0 %106
    %110 = vset.pattern.permute.xlu0 0
    %111 = vperm.xlu0 %110, %v69
    %v112 = vpop.permute.xlu0 %111
    %115 = vset.pattern.permute.xlu0 0
    %116 = vperm.xlu0 %115, %v70
    %v117 = vpop.permute.xlu0 %116
    %120 = vset.pattern.permute.xlu0 0
    %121 = vperm.xlu0 %120, %v71
    %v122 = vpop.permute.xlu0 %121
    %125 = vset.pattern.permute.xlu0 0
    %126 = vperm.xlu0 %125, %v72
    %v127 = vpop.permute.xlu0 %126
    %130 = vset.pattern.permute.xlu0 0
    %131 = vperm.xlu0 %130, %v73
    %v132 = vpop.permute.xlu0 %131
    %135 = vset.pattern.permute.xlu0 0
    %136 = vperm.xlu0 %135, %v74
    %v137 = vpop.permute.xlu0 %136
    %140 = vset.pattern.permute.xlu0 0
    %141 = vperm.xlu0 %140, %v75
    %v142 = vpop.permute.xlu0 %141
    %145 = vset.pattern.permute.xlu0 0
    %146 = vperm.xlu0 %145, %v76
    %v147 = vpop.permute.xlu0 %146
    %150 = vset.pattern.permute.xlu0 0
    %151 = vperm.xlu0 %150, %v77
    %v152 = vpop.permute.xlu0 %151
    %155 = vset.pattern.permute.xlu0 0
    %156 = vperm.xlu0 %155, %v78
    %v157 = vpop.permute.xlu0 %156
    %v175 = vunpack.c.l.b16 %v47
    %v176 = vunpack.c.l.b16 %v48
    %v177 = vunpack.c.l.b16 %v49
    %v178 = vunpack.c.l.b16 %v50
    %v179 = vunpack.c.l.b16 %v51
    %v180 = vunpack.c.l.b16 %v52
    %v181 = vunpack.c.l.b16 %v53
    %v182 = vunpack.c.l.b16 %v54
    %v183 = vunpack.c.l.b16 %v55
    %v184 = vunpack.c.l.b16 %v56
    %v185 = vunpack.c.l.b16 %v57
    %v186 = vunpack.c.l.b16 %v58
    %v187 = vunpack.c.l.b16 %v59
    %v188 = vunpack.c.l.b16 %v60
    %v189 = vunpack.c.l.b16 %v61
    %v190 = vunpack.c.l.b16 %v62
    %v191 = vpack.c.b16 %v176, %v175
    %v192 = vpack.c.b16 %v178, %v177
    %v193 = vpack.c.b16 %v180, %v179
    %v194 = vpack.c.b16 %v182, %v181
    %v195 = vpack.c.b16 %v184, %v183
    %v196 = vpack.c.b16 %v186, %v185
    %v197 = vpack.c.b16 %v188, %v187
    %v198 = vpack.c.b16 %v190, %v189
    %vm199 = vcmask 523264
    %v201 = vsel %vm199, %v191, 0
    %v204 = vsel %vm199, %v192, 0
    %v207 = vsel %vm199, %v193, 0
    %v210 = vsel %vm199, %v194, 0
    %v213 = vsel %vm199, %v195, 0
    %v216 = vsel %vm199, %v196, 0
    %v219 = vsel %vm199, %v197, 0
    %v222 = vsel %vm199, %v198, 0
    %v225 = vsel %vm199, %v39, 0
    %v228 = vsel %vm199, %v40, 0
    %v231 = vsel %vm199, %v41, 0
    %v234 = vsel %vm199, %v42, 0
    %v237 = vsel %vm199, %v43, 0
    %v240 = vsel %vm199, %v44, 0
    %v243 = vsel %vm199, %v45, 0
    %v246 = vsel %vm199, %v46, 0
    %248 = vmatprep.subr.bf16.mxu0 0
    %249 = vmatpush1.bf16.xpose.msra.mxu0 %v225
    %250 = vmatprep.subr.bf16.mxu0 0
    %251 = vmatpush1.bf16.xpose.msra.mxu0 %v228
    %252 = vmatprep.subr.bf16.mxu0 0
    %253 = vmatpush1.bf16.xpose.msra.mxu0 %v231
    %254 = vmatprep.subr.bf16.mxu0 0
    %255 = vmatpush1.bf16.xpose.msra.mxu0 %v234
    %256 = vmatprep.subr.bf16.mxu0 0
    %257 = vmatpush1.bf16.xpose.msra.mxu0 %v237
    %258 = vmatprep.subr.bf16.mxu0 0
    %259 = vmatpush1.bf16.xpose.msra.mxu0 %v240
    %260 = vmatprep.subr.bf16.mxu0 0
    %261 = vmatpush1.bf16.xpose.msra.mxu0 %v243
    %262 = vmatprep.subr.bf16.mxu0 0
    %263 = vmatpush1.bf16.xpose.msra.mxu0 %v246
    %264 = vmatprep.subr.bf16.mxu0 0
    %265 = vmatpush1.bf16.xpose.msra.mxu0 0
    %266 = vmatprep.subr.bf16.mxu0 0
    %267 = vmatpush1.bf16.xpose.msra.mxu0 0
    %268 = vmatprep.subr.bf16.mxu0 0
    %269 = vmatpush1.bf16.xpose.msra.mxu0 0
    %270 = vmatprep.subr.bf16.mxu0 0
    %271 = vmatpush1.bf16.xpose.msra.mxu0 0
    %272 = vmatprep.subr.bf16.mxu0 0
    %273 = vmatpush1.bf16.xpose.msra.mxu0 0
    %274 = vmatprep.subr.bf16.mxu0 0
    %275 = vmatpush1.bf16.xpose.msra.mxu0 0
    %276 = vmatprep.subr.bf16.mxu0 0
    %277 = vmatpush1.bf16.xpose.msra.mxu0 0
    %278 = vmatprep.subr.bf16.mxu0 0
    %279 = vmatpush1.bf16.xpose.msra.mxu0 0
    %280 = vmatprep.mubr.bf16.mxu0 0
    %281 = vmatmul.mubr.bf16.gmra.mrb[0].mxu0 %v201
    %v282 = vpop.f32.mrb[0].mxu0
    %v283 = vadd.f32 %v82, %v282
    %v284 = vpop.f32.mrb[0].mxu0
    %v285 = vpop.f32.mrb[0].mxu0
    %v286 = vadd.f32 %v87, %v285
    %v287 = vpop.f32.mrb[0].mxu0
    %288 = vmatprep.mubr.bf16.mxu0 0
    %289 = vmatmul.mubr.bf16.gmra.mrb[0].mxu0 %v204
    %v290 = vpop.f32.mrb[0].mxu0
    %v291 = vadd.f32 %v92, %v290
    %v292 = vpop.f32.mrb[0].mxu0
    %v293 = vpop.f32.mrb[0].mxu0
    %v294 = vadd.f32 %v97, %v293
    %v295 = vpop.f32.mrb[0].mxu0
    %296 = vmatprep.mubr.bf16.mxu0 0
    %297 = vmatmul.mubr.bf16.gmra.mrb[0].mxu0 %v207
    %v298 = vpop.f32.mrb[0].mxu0
    %v299 = vadd.f32 %v102, %v298
    %v300 = vpop.f32.mrb[0].mxu0
    %v301 = vpop.f32.mrb[0].mxu0
    %v302 = vadd.f32 %v107, %v301
    %v303 = vpop.f32.mrb[0].mxu0
    %304 = vmatprep.mubr.bf16.mxu0 0
    %305 = vmatmul.mubr.bf16.gmra.mrb[0].mxu0 %v210
    %v306 = vpop.f32.mrb[0].mxu0
    %v307 = vadd.f32 %v112, %v306
    %v308 = vpop.f32.mrb[0].mxu0
    %v309 = vpop.f32.mrb[0].mxu0
    %v310 = vadd.f32 %v117, %v309
    %v311 = vpop.f32.mrb[0].mxu0
    %312 = vmatprep.mubr.bf16.mxu0 0
    %313 = vmatmul.mubr.bf16.gmra.mrb[0].mxu0 %v213
    %v314 = vpop.f32.mrb[0].mxu0
    %v315 = vadd.f32 %v122, %v314
    %v316 = vpop.f32.mrb[0].mxu0
    %v317 = vpop.f32.mrb[0].mxu0
    %v318 = vadd.f32 %v127, %v317
    %v319 = vpop.f32.mrb[0].mxu0
    %320 = vmatprep.mubr.bf16.mxu0 0
    %321 = vmatmul.mubr.bf16.gmra.mrb[0].mxu0 %v216
    %v322 = vpop.f32.mrb[0].mxu0
    %v323 = vadd.f32 %v132, %v322
    %v324 = vpop.f32.mrb[0].mxu0
    %v325 = vpop.f32.mrb[0].mxu0
    %v326 = vadd.f32 %v137, %v325
    %v327 = vpop.f32.mrb[0].mxu0
    %328 = vmatprep.mubr.bf16.mxu0 0
    %329 = vmatmul.mubr.bf16.gmra.mrb[0].mxu0 %v219
    %v330 = vpop.f32.mrb[0].mxu0
    %v331 = vadd.f32 %v142, %v330
    %v332 = vpop.f32.mrb[0].mxu0
    %v333 = vpop.f32.mrb[0].mxu0
    %v334 = vadd.f32 %v147, %v333
    %v335 = vpop.f32.mrb[0].mxu0
    %336 = vmatprep.mubr.bf16.mxu0 0
    %337 = vmatmul.mubr.bf16.gmra.mrb[0].mxu0 %v222
    %v338 = vpop.f32.mrb[0].mxu0
    %v339 = vadd.f32 %v152, %v338
    %v340 = vpop.f32.mrb[0].mxu0
    %v341 = vpop.f32.mrb[0].mxu0
    %v342 = vadd.f32 %v157, %v341
    %v343 = vpop.f32.mrb[0].mxu0
    %344 = vdwg.mxu0
    %vm345 = vcmp.gt.f32.partialorder %v283, 0.0
    %vm346 = vcmp.gt.f32.partialorder %v286, 0.0
    %vm347 = vcmp.gt.f32.partialorder %v291, 0.0
    %vm348 = vcmp.gt.f32.partialorder %v294, 0.0
    %vm349 = vcmp.gt.f32.partialorder %v299, 0.0
    %vm350 = vcmp.gt.f32.partialorder %v302, 0.0
    %vm351 = vcmp.gt.f32.partialorder %v307, 0.0
    %vm352 = vcmp.gt.f32.partialorder %v310, 0.0
    %vm353 = vcmp.gt.f32.partialorder %v315, 0.0
    %vm354 = vcmp.gt.f32.partialorder %v318, 0.0
    %vm355 = vcmp.gt.f32.partialorder %v323, 0.0
    %vm356 = vcmp.gt.f32.partialorder %v326, 0.0
    %vm357 = vcmp.gt.f32.partialorder %v331, 0.0
    %vm358 = vcmp.gt.f32.partialorder %v334, 0.0
    %vm359 = vcmp.gt.f32.partialorder %v339, 0.0
    %vm360 = vcmp.gt.f32.partialorder %v342, 0.0
    %v361 = vmul.f32 %v283, 0.1
    %v362 = vmul.f32 %v286, 0.1
    %v363 = vmul.f32 %v291, 0.1
    %v364 = vmul.f32 %v294, 0.1
    %v365 = vmul.f32 %v299, 0.1
    %v366 = vmul.f32 %v302, 0.1
    %v367 = vmul.f32 %v307, 0.1
    %v368 = vmul.f32 %v310, 0.1
    %v369 = vmul.f32 %v315, 0.1
    %v370 = vmul.f32 %v318, 0.1
    %v371 = vmul.f32 %v323, 0.1
    %v372 = vmul.f32 %v326, 0.1
    %v373 = vmul.f32 %v331, 0.1
    %v374 = vmul.f32 %v334, 0.1
    %v375 = vmul.f32 %v339, 0.1
    %v376 = vmul.f32 %v342, 0.1
    %v377 = vsel %vm345, %v283, %v361
    %v378 = vsel %vm346, %v286, %v362
    %v379 = vsel %vm347, %v291, %v363
    %v380 = vsel %vm348, %v294, %v364
    %v381 = vsel %vm349, %v299, %v365
    %v382 = vsel %vm350, %v302, %v366
    %v383 = vsel %vm351, %v307, %v367
    %v384 = vsel %vm352, %v310, %v368
    %v385 = vsel %vm353, %v315, %v369
    %v386 = vsel %vm354, %v318, %v370
    %v387 = vsel %vm355, %v323, %v371
    %v388 = vsel %vm356, %v326, %v372
    %v389 = vsel %vm357, %v331, %v373
    %v390 = vsel %vm358, %v334, %v374
    %v391 = vsel %vm359, %v339, %v375
    %v392 = vsel %vm360, %v342, %v376
    %v393 = vld [vmem:[%s3] sm:$0xff]
    %v394 = vld [vmem:[%s3 + $0x8] sm:$0xff]
    %v395 = vld [vmem:[%s3 + $0x10] sm:$0xff]
    %v396 = vld [vmem:[%s3 + $0x18] sm:$0xff]
    %v397 = vld [vmem:[%s3 + $0x20] sm:$0xff]
    %v398 = vld [vmem:[%s3 + $0x28] sm:$0xff]
    %v399 = vld [vmem:[%s3 + $0x30] sm:$0xff]
    %v400 = vld [vmem:[%s3 + $0x38] sm:$0xff]
    %v401 = vld [vmem:[%s3 + $0x40] sm:$0xff]
    %v402 = vld [vmem:[%s3 + $0x48] sm:$0xff]
    %v403 = vld [vmem:[%s3 + $0x50] sm:$0xff]
    %v404 = vld [vmem:[%s3 + $0x58] sm:$0xff]
    %v405 = vld [vmem:[%s3 + $0x60] sm:$0xff]
    %v406 = vld [vmem:[%s3 + $0x68] sm:$0xff]
    %v407 = vld [vmem:[%s3 + $0x70] sm:$0xff]
    %v408 = vld [vmem:[%s3 + $0x78] sm:$0xff]
    %410 = vset.pattern.permute.xlu0 0
    %411 = vperm.xlu0 %410, %v393
    %v412 = vpop.permute.xlu0 %411
    %415 = vset.pattern.permute.xlu0 0
    %416 = vperm.xlu0 %415, %v394
    %v417 = vpop.permute.xlu0 %416
    %420 = vset.pattern.permute.xlu0 0
    %421 = vperm.xlu0 %420, %v395
    %v422 = vpop.permute.xlu0 %421
    %425 = vset.pattern.permute.xlu0 0
    %426 = vperm.xlu0 %425, %v396
    %v427 = vpop.permute.xlu0 %426
    %430 = vset.pattern.permute.xlu0 0
    %431 = vperm.xlu0 %430, %v397
    %v432 = vpop.permute.xlu0 %431
    %435 = vset.pattern.permute.xlu0 0
    %436 = vperm.xlu0 %435, %v398
    %v437 = vpop.permute.xlu0 %436
    %440 = vset.pattern.permute.xlu0 0
    %441 = vperm.xlu0 %440, %v399
    %v442 = vpop.permute.xlu0 %441
    %445 = vset.pattern.permute.xlu0 0
    %446 = vperm.xlu0 %445, %v400
    %v447 = vpop.permute.xlu0 %446
    %450 = vset.pattern.permute.xlu0 0
    %451 = vperm.xlu0 %450, %v401
    %v452 = vpop.permute.xlu0 %451
    %455 = vset.pattern.permute.xlu0 0
    %456 = vperm.xlu0 %455, %v402
    %v457 = vpop.permute.xlu0 %456
    %460 = vset.pattern.permute.xlu0 0
    %461 = vperm.xlu0 %460, %v403
    %v462 = vpop.permute.xlu0 %461
    %465 = vset.pattern.permute.xlu0 0
    %466 = vperm.xlu0 %465, %v404
    %v467 = vpop.permute.xlu0 %466
    %470 = vset.pattern.permute.xlu0 0
    %471 = vperm.xlu0 %470, %v405
    %v472 = vpop.permute.xlu0 %471
    %475 = vset.pattern.permute.xlu0 0
    %476 = vperm.xlu0 %475, %v406
    %v477 = vpop.permute.xlu0 %476
    %480 = vset.pattern.permute.xlu0 0
    %481 = vperm.xlu0 %480, %v407
    %v482 = vpop.permute.xlu0 %481
    %485 = vset.pattern.permute.xlu0 0
    %486 = vperm.xlu0 %485, %v408
    %v487 = vpop.permute.xlu0 %486
    %v489 = vmul.f32 %v377, %v412
    %v490 = vmul.f32 %v378, %v417
    %v491 = vmul.f32 %v379, %v422
    %v492 = vmul.f32 %v380, %v427
    %v493 = vmul.f32 %v381, %v432
    %v494 = vmul.f32 %v382, %v437
    %v495 = vmul.f32 %v383, %v442
    %v496 = vmul.f32 %v384, %v447
    %v497 = vmul.f32 %v385, %v452
    %v498 = vmul.f32 %v386, %v457
    %v499 = vmul.f32 %v387, %v462
    %v500 = vmul.f32 %v388, %v467
    %v501 = vmul.f32 %v389, %v472
    %v502 = vmul.f32 %v390, %v477
    %v503 = vmul.f32 %v391, %v482
    %v504 = vmul.f32 %v392, %v487
    %v505 = vadd.f32 %v489, %v490
    %v506 = vadd.f32 %v505, %v491
    %v507 = vadd.f32 %v506, %v492
    %v508 = vadd.f32 %v507, %v493
    %v509 = vadd.f32 %v508, %v494
    %v510 = vadd.f32 %v509, %v495
    %v511 = vadd.f32 %v510, %v496
    %v512 = vadd.f32 %v511, %v497
    %v513 = vadd.f32 %v512, %v498
    %v514 = vadd.f32 %v513, %v499
    %v515 = vadd.f32 %v514, %v500
    %v516 = vadd.f32 %v515, %v501
    %v517 = vadd.f32 %v516, %v502
    %v518 = vadd.f32 %v517, %v503
    %v519 = vadd.f32 %v518, %v504
    %v520 = vrot.slane %v519, 4
    %v521 = vadd.f32 %v519, %v520
    %v522 = vrot.slane %v521, 2
    %v523 = vadd.f32 %v521, %v522
    %v524 = vrot.slane %v523, 1
    %v525 = vadd.f32 %v523, %v524
    %s526 = sld [smem:[#allocation2]]
    %v527 = vstv %s526
    %v528 = vadd.f32 %v525, %v527
    %v529 = vsub.f32 0.0, %v528
    %v530 = vmul.f32 %v529, 1.442695
    %v531 = vpow.pop %v530
    %v532 = vadd.f32 %v531, 1.0
    %v533 = vrcp.pop %v532
    %v534 = vmul.f32 1.0, %v533
    %535 = vst [vmem:[#allocation3] sm:$0x1] %v534
    // Predicated region
    $region22: #{tpu_custom_call.1} parent=1 // pred_check
      _
    $region23: #{tpu_custom_call.1} parent=1 // pred_check_branch
      %537 = sbr.rel (0) target = $region25
    $region24: #{tpu_custom_call.1} parent=1 // pred_region
      %s539 = ssub.s32 16, 16
      %540 = vsyncadd [#allocation4], %s539
      %s542 = sshll.u32 [#allocation3], 4
      %s543 = int_to_ptr.vmem [resolvable:$true] %s542
      %545 = dma.vmem_to_hbm [thread:$0]  %s543, 16, %s5, [#allocation4]
    $region25: #{tpu_custom_call.1} parent=1 // pred_fallthru
      _
    // Predicated region
    $region26: #{tpu_custom_call.1} parent=1 // pred_check
      _
    $region27: #{tpu_custom_call.1} parent=1 // pred_check_branch
      %547 = sbr.rel (0) target = $region29
    $region28: #{tpu_custom_call.1} parent=1 // pred_region
      %548 = dma.done [#allocation4], 16
    $region29: #{tpu_custom_call.1} parent=1 // pred_fallthru
      _
    %549 = vsyncpa [#allocation4], 1

</llo_original>
